<compile_context>
chip_gen: v7x
topology: tpu7x:2x2x1
jax: 0.10.0
libtpu: 0.0.40
codegen_flags: <defaults>
</compile_context>

<pallas_src>
import functools
import numpy as np
import jax
import jax.numpy as jnp
from jax.experimental import pallas as pl
from jax.experimental.pallas import tpu as pltpu

SQRT_HALF = 0.7071067811865476
MXU_DTYPE = jnp.bfloat16                 # operand dtype fed to the MXU
BLOCK_M = 512                            # max row tile for matmul / LN kernels


def _round_up(x, m):
    return (x + m - 1) // m * m


def _detect_vmem_limit():
    # 3/4 of physical VMEM: ~48 MiB on v7x (64 MiB), ~96 MiB on v5e/v6e (128 MiB).
    try:
        if jax.devices()[0].platform == "tpu":
            cap = int(pltpu.get_tpu_info().vmem_capacity_bytes)
            return max(32 * 1024 * 1024, min(cap * 3 // 4, 100 * 1024 * 1024))
    except Exception:
        pass
    return 48 * 1024 * 1024


VMEM_LIMIT = _detect_vmem_limit()


def _cparams(*sem):
    return pltpu.CompilerParams(dimension_semantics=sem,
                                vmem_limit_bytes=VMEM_LIMIT)


def _row_tile(M):
    # >= 2 grid steps whenever M > 8, so both v7x TensorCores get work; free on
    # single-TC v5e/v6e.
    return min(BLOCK_M, _round_up(-(-M // 2), 8))


# ----------------------------------------------------------------------------
# In-kernel math helpers
# ----------------------------------------------------------------------------
def _erf(x):
    # float32-accurate Abramowitz-Stegun erf (max abs err ~1.5e-7); reproduces
    # PyTorch's exact (erf-based) F.gelu to float32 precision.
    p = 0.3275911
    a1, a2, a3, a4, a5 = (0.254829592, -0.284496736, 1.421413741,
                          -1.453152027, 1.061405429)
    ax = jnp.abs(x)
    t = 1.0 / (1.0 + p * ax)
    poly = ((((a5 * t + a4) * t + a3) * t + a2) * t + a1) * t
    y = 1.0 - poly * jnp.exp(-ax * ax)
    return jnp.where(x >= 0, y, -y)


def _gelu_exact(x):
    return 0.5 * x * (1.0 + _erf(x * SQRT_HALF))


# ----------------------------------------------------------------------------
# Pallas kernel: M-tiled matmul + bias (+ optional fused GELU), bf16 MXU.
# ----------------------------------------------------------------------------
def _matmul_bias_kernel(x_ref, w_ref, b_ref, o_ref, *, apply_gelu):
    y = jnp.dot(x_ref[...], w_ref[...], preferred_element_type=jnp.float32)
    y = y + b_ref[...]
    if apply_gelu:
        y = _gelu_exact(y)
    o_ref[...] = y


def matmul_bias(x, w, b, apply_gelu=False):
    # x: (M, K)  w: (K, N)  b: (N,) -> (M, N) f32; M tiled, grid "parallel".
    M, K = x.shape
    N = w.shape[1]
    tm = _row_tile(M)
    Mp = _round_up(M, tm)
    xf = x.astype(MXU_DTYPE)
    if Mp != M:
        xf = jnp.pad(xf, ((0, Mp - M), (0, 0)))
    out = pl.pallas_call(
        functools.partial(_matmul_bias_kernel, apply_gelu=apply_gelu),
        out_shape=jax.ShapeDtypeStruct((Mp, N), jnp.float32),
        grid=(Mp // tm,),
        in_specs=[pl.BlockSpec((tm, K), lambda i: (i, 0)),
                  pl.BlockSpec((K, N), lambda i: (0, 0)),
                  pl.BlockSpec((1, N), lambda i: (0, 0))],
        out_specs=pl.BlockSpec((tm, N), lambda i: (i, 0)),
        compiler_params=_cparams("parallel"),
    )(xf, w.astype(MXU_DTYPE), b.reshape(1, N).astype(jnp.float32))
    return out[:M] if Mp != M else out


# ----------------------------------------------------------------------------
# Pallas kernel: row-wise LayerNorm (last dim, eps=1e-5) + exact GELU, M-tiled
# (BiGRU pre-norm; last dim is lane friendly).  f32 VPU math.
# ----------------------------------------------------------------------------
def _ln_gelu_rows_kernel(x_ref, g_ref, b_ref, o_ref):
    x = x_ref[...]
    mean = jnp.mean(x, axis=-1, keepdims=True)
    var = jnp.mean(jnp.square(x - mean), axis=-1, keepdims=True)
    y = (x - mean) * jax.lax.rsqrt(var + 1e-5) * g_ref[...] + b_ref[...]
    o_ref[...] = _gelu_exact(y)


def ln_gelu_rows(x2d, gamma, beta):
    R, F = x2d.shape
    tm = _row_tile(R)
    Rp = _round_up(R, tm)
    xf = x2d.astype(jnp.float32)
    if Rp != R:
        xf = jnp.pad(xf, ((0, Rp - R), (0, 0)))
    out = pl.pallas_call(
        _ln_gelu_rows_kernel,
        out_shape=jax.ShapeDtypeStruct((Rp, F), jnp.float32),
        grid=(Rp // tm,),
        in_specs=[pl.BlockSpec((tm, F), lambda i: (i, 0)),
                  pl.BlockSpec((1, F), lambda i: (0, 0)),
                  pl.BlockSpec((1, F), lambda i: (0, 0))],
        out_specs=pl.BlockSpec((tm, F), lambda i: (i, 0)),
        compiler_params=_cparams("parallel"),
    )(xf, gamma.reshape(1, F).astype(jnp.float32),
      beta.reshape(1, F).astype(jnp.float32))
    return out[:R] if Rp != R else out


# ----------------------------------------------------------------------------
# Pallas kernel: CNNLayerNorm (over feature axis F) + GELU, channels-last.
# Input presented as (B, F, T*C): reduce over the sublane axis F, lane dim is
# T*C (lane-dense), gamma/beta broadcast along lanes.
# ----------------------------------------------------------------------------
def _cnn_ln_gelu_kernel(x_ref, g_ref, b_ref, o_ref):
    x = x_ref[0]                                       # (F, T*C)
    mean = jnp.mean(x, axis=0, keepdims=True)
    var = jnp.mean(jnp.square(x - mean), axis=0, keepdims=True)
    xn = (x - mean) * jax.lax.rsqrt(var + 1e-5)
    o_ref[0] = _gelu_exact(xn * g_ref[...] + b_ref[...])


def cnn_ln_gelu(x_cl, gamma, beta):
    # x_cl: (B, F, T, C) channels-last; normalize over F per (b, t, c), + GELU.
    B, F, T, C = x_cl.shape
    x2 = x_cl.reshape(B, F, T * C).astype(jnp.float32)
    out = pl.pallas_call(
        _cnn_ln_gelu_kernel,
        out_shape=jax.ShapeDtypeStruct((B, F, T * C), jnp.float32),
        grid=(B,),
        in_specs=[pl.BlockSpec((1, F, T * C), lambda b: (b, 0, 0)),
                  pl.BlockSpec((F, 1), lambda b: (0, 0)),
                  pl.BlockSpec((F, 1), lambda b: (0, 0))],
        out_specs=pl.BlockSpec((1, F, T * C), lambda b: (b, 0, 0)),
        compiler_params=_cparams("parallel"),
    )(x2, gamma.reshape(F, 1).astype(jnp.float32),
      beta.reshape(F, 1).astype(jnp.float32))
    return out.reshape(B, F, T, C)


# ----------------------------------------------------------------------------
# Pallas kernel: 3x3 / stride-1 / pad-1 conv, channels-last, in-kernel "im2col"
# The padded image is flattened to (Rpad, Cin) with Rpad >= Fp*Tp + 2 so every
# tap slice [kh*Tp+kw : kh*Tp+kw+M] is in bounds; the conv is 9 accumulated
# bf16 matmuls with no patches tensor in HBM.  Seam columns (t >= T) are
# garbage and sliced off afterwards (XLA fuses the slice with the residual add).
# ----------------------------------------------------------------------------
def _conv3x3_kernel(x_ref, w_ref, b_ref, o_ref, *, M, Tp):
    x = x_ref[0]                                       # (Rpad, Cin) bf16
    acc = jnp.dot(x[0:M, :], w_ref[0], preferred_element_type=jnp.float32)
    for kh in range(3):
        for kw in range(3):
            if kh == 0 and kw == 0:
                continue
            r0 = kh * Tp + kw
            acc = acc + jnp.dot(x[r0:r0 + M, :], w_ref[kh * 3 + kw],
                                preferred_element_type=jnp.float32)
    o_ref[0] = acc + b_ref[...]


def conv3x3_cl(x_cl, w, b):
    # x_cl: (B, F, T, Cin);  w: (Cout, Cin, 3, 3);  b: (Cout,) -> (B, F, T, Cout)
    B, F, T, Cin = x_cl.shape
    Cout = w.shape[0]
    Fp, Tp = F + 2, T + 2
    M = F * Tp
    Rpad = _round_up(Fp * Tp + 2, 8)                   # room for the deepest tap
    xp = jnp.pad(x_cl.astype(MXU_DTYPE), ((0, 0), (1, 1), (1, 1), (0, 0)))
    xp = xp.reshape(B, Fp * Tp, Cin)
    if Rpad != Fp * Tp:
        xp = jnp.pad(xp, ((0, 0), (0, Rpad - Fp * Tp), (0, 0)))
    w9 = w.transpose(2, 3, 1, 0).reshape(9, Cin, Cout).astype(MXU_DTYPE)
    out = pl.pallas_call(
        functools.partial(_conv3x3_kernel, M=M, Tp=Tp),
        out_shape=jax.ShapeDtypeStruct((B, M, Cout), jnp.float32),
        grid=(B,),
        in_specs=[pl.BlockSpec((1, Rpad, Cin), lambda i: (i, 0, 0)),
                  pl.BlockSpec((9, Cin, Cout), lambda i: (0, 0, 0)),
                  pl.BlockSpec((1, Cout), lambda i: (0, 0))],
        out_specs=pl.BlockSpec((1, M, Cout), lambda i: (i, 0, 0)),
        compiler_params=_cparams("parallel"),
    )(xp, w9, b.reshape(1, Cout).astype(jnp.float32))
    return out.reshape(B, F, Tp, Cout)[:, :, :T, :]


# ----------------------------------------------------------------------------
# Stem conv (1 -> 32 channels, stride 2): im2col stays in JAX (Cin=1, K=9 is
# tiny), matmul in Pallas; output produced directly in channels-last layout.
# ----------------------------------------------------------------------------
def conv2d_stem(x, w, b, stride, padding):
    B, Cin, Hin, Win = x.shape
    Cout, _, k, _ = w.shape
    Ho = (Hin + 2 * padding - k) // stride + 1
    Wo = (Win + 2 * padding - k) // stride + 1
    xp = jnp.pad(x, ((0, 0), (0, 0), (padding, padding), (padding, padding)))
    cols = [xp[:, :, kh:kh + Ho * stride:stride, kw:kw + Wo * stride:stride]
            for kh in range(k) for kw in range(k)]
    patches = jnp.stack(cols, axis=2)                  # (B, Cin, 9, Ho, Wo)
    patches = patches.transpose(0, 3, 4, 1, 2).reshape(B * Ho * Wo, Cin * k * k)
    wmat = w.reshape(Cout, Cin * k * k).T
    y = matmul_bias(patches, wmat, b)                  # (B*Ho*Wo, Cout)
    return y.reshape(B, Ho, Wo, Cout)                  # channels-last (B, F, T, C)


# ----------------------------------------------------------------------------
# Pallas kernel: fused bidirectional GRU recurrence.
# Gate columns are grouped [r_f r_b | z_f z_b | n_f n_b] so one block-diagonal
# (B,2H)x(2H,6H) bf16 matmul per timestep drives BOTH directions, and the new
# hidden state is directly the (B,2H) tensor (no concat).  The backward gate
# columns of the prefetched gx block are already time-flipped, so the in-kernel
# loop runs both directions in the same ascending order.  PyTorch gate order
# r,z,n; b_ir+b_hr / b_iz+b_hz pre-folded into gx, b_hn applied inside.
# ----------------------------------------------------------------------------
def _bigru_kernel(gq_ref, w_ref, bn_ref, of_ref, ob_ref, h_ref, *, TB, H, pad):
    t = pl.program_id(0)

    @pl.when(t == 0)
    def _():
        h_ref[...] = jnp.zeros_like(h_ref)

    w = w_ref[...]                                     # (2H, 6H) bf16 block-diag
    bn = bn_ref[...]                                   # (1, 2H) = [b_hn_f | b_hn_b]
    base = t * TB
    h = h_ref[...]                                     # (B, 2H) f32 carried in regs
    if pad:
        keep_fwd = jax.lax.broadcasted_iota(jnp.int32, h.shape, 1) < H

    for s in range(TB):                                # static unroll
        gh = jnp.dot(h.astype(MXU_DTYPE), w,
                     preferred_element_type=jnp.float32)            # (B, 6H)
        gx = gq_ref[s]                                               # (B, 6H)
        r = jax.nn.sigmoid(gx[:, 0:2 * H] + gh[:, 0:2 * H])
        z = jax.nn.sigmoid(gx[:, 2 * H:4 * H] + gh[:, 2 * H:4 * H])
        n = jnp.tanh(gx[:, 4 * H:6 * H] + r * (gh[:, 4 * H:6 * H] + bn))
        h_new = (1.0 - z) * n + z * h
        if pad:
            # first `pad` processed backward steps are time-padding: keep h_b = 0
            h_new = jnp.where(jnp.logical_or(base + s >= pad, keep_fwd), h_new, h)
        of_ref[s] = h_new[:, :H]
        ob_ref[TB - 1 - s] = h_new[:, H:]
        h = h_new

    h_ref[...] = h


def bigru(xs, layer, time_block=32):
    # xs: (T, B, F) -> (T, B, 2H); h0 = 0 for both directions.
    T, B, F = xs.shape
    H = layer['w_hh'].shape[1]
    xs2 = xs.reshape(T * B, F)

    def fold_bias(b_ih, b_hh):
        # fold b_hr, b_hz into the input projection; b_hn must stay inside.
        return b_ih + jnp.concatenate([b_hh[:2 * H], jnp.zeros((H,), jnp.float32)])

    # ---- ONE input projection for both directions, gate-grouped columns -----
    wif, wib = layer['w_ih'].T, layer['w_ih_rev'].T            # (F, 3H)
    w_in = jnp.concatenate([wif[:, 0:H], wib[:, 0:H],
                            wif[:, H:2 * H], wib[:, H:2 * H],
                            wif[:, 2 * H:], wib[:, 2 * H:]], axis=1)   # (F, 6H)
    bf = fold_bias(layer['b_ih'], layer['b_hh'])
    bb = fold_bias(layer['b_ih_rev'], layer['b_hh_rev'])
    b_in = jnp.concatenate([bf[0:H], bb[0:H], bf[H:2 * H], bb[H:2 * H],
                            bf[2 * H:], bb[2 * H:]])
    gx = matmul_bias(xs2, w_in, b_in).reshape(T, B, 6 * H)

    TB = min(time_block, T)
    NB = -(-T // TB)
    Tp = NB * TB
    pad = Tp - T
    if pad:
        gx = jnp.pad(gx, ((0, pad), (0, 0), (0, 0)))

    # backward gate columns get the time-reversed sequence
    is_fwd_col = (jnp.arange(6 * H) % (2 * H)) < H
    gq = jnp.where(is_fwd_col[None, None, :], gx, jnp.flip(gx, axis=0))

    # block-diagonal recurrent weight, gate-grouped columns
    whf, whb = layer['w_hh'].T, layer['w_hh_rev'].T            # (H, 3H)
    wcat = jnp.zeros((2 * H, 6 * H), jnp.float32)
    for g in range(3):                                         # r, z, n
        wcat = wcat.at[:H, g * 2 * H:g * 2 * H + H].set(whf[:, g * H:(g + 1) * H])
        wcat = wcat.at[H:, g * 2 * H + H:(g + 1) * 2 * H].set(whb[:, g * H:(g + 1) * H])
    wcat = wcat.astype(MXU_DTYPE)
    bn = jnp.concatenate([layer['b_hh'][2 * H:],
                          layer['b_hh_rev'][2 * H:]]).reshape(1, 2 * H).astype(jnp.float32)

    seq_spec = pl.BlockSpec((TB, B, 6 * H), lambda t: (t, 0, 0))
    mat_spec = pl.BlockSpec((2 * H, 6 * H), lambda t: (0, 0))
    vec_spec = pl.BlockSpec((1, 2 * H), lambda t: (0, 0))
    out_f = pl.BlockSpec((TB, B, H), lambda t: (t, 0, 0))
    out_b = pl.BlockSpec((TB, B, H), lambda t: (NB - 1 - t, 0, 0))

    of, ob = pl.pallas_call(
        functools.partial(_bigru_kernel, TB=TB, H=H, pad=pad),
        out_shape=(jax.ShapeDtypeStruct((Tp, B, H), jnp.float32),
                   jax.ShapeDtypeStruct((Tp, B, H), jnp.float32)),
        grid_spec=pltpu.PrefetchScalarGridSpec(
            num_scalar_prefetch=0,
            grid=(NB,),
            in_specs=[seq_spec, mat_spec, vec_spec],
            out_specs=[out_f, out_b],
            scratch_shapes=[pltpu.VMEM((B, 2 * H), jnp.float32)]),
        compiler_params=_cparams("arbitrary"),
    )(gq, wcat, bn)
    # TODO(synk): for H % 128 == 0, write both directions into one (Tp,B,2H)
    #             output via disjoint lane blocks and drop this concatenate.
    return jnp.concatenate([of[:T], ob[:T]], axis=-1)


# ----------------------------------------------------------------------------
# Pallas kernel: fused classifier Linear + GELU + Linear (lane-dense output)
# ----------------------------------------------------------------------------
def _classifier_kernel(x_ref, w1_ref, b1_ref, w2_ref, b2_ref, o_ref):
    h = jnp.dot(x_ref[...], w1_ref[...], preferred_element_type=jnp.float32)
    h = _gelu_exact(h + b1_ref[...])
    o_ref[...] = jnp.dot(h.astype(MXU_DTYPE), w2_ref[...],
                         preferred_element_type=jnp.float32) + b2_ref[...]


def classifier(x2d, w1, b1, w2, b2):
    M, K = x2d.shape
    Hc = w1.shape[0]
    n_class = w2.shape[0]
    Np = _round_up(n_class, 128)              # pad output to a lane-dense store
    w2p = jnp.zeros((Hc, Np), MXU_DTYPE).at[:, :n_class].set(w2.T.astype(MXU_DTYPE))
    b2p = jnp.zeros((1, Np), jnp.float32).at[:, :n_class].set(b2.reshape(1, n_class))
    tm = _row_tile(M)
    Mp = _round_up(M, tm)
    xf = x2d.astype(MXU_DTYPE)
    if Mp != M:
        xf = jnp.pad(xf, ((0, Mp - M), (0, 0)))
    out = pl.pallas_call(
        _classifier_kernel,
        out_shape=jax.ShapeDtypeStruct((Mp, Np), jnp.float32),
        grid=(Mp // tm,),
        in_specs=[pl.BlockSpec((tm, K), lambda i: (i, 0)),
                  pl.BlockSpec((K, Hc), lambda i: (0, 0)),
                  pl.BlockSpec((1, Hc), lambda i: (0, 0)),
                  pl.BlockSpec((Hc, Np), lambda i: (0, 0)),
                  pl.BlockSpec((1, Np), lambda i: (0, 0))],
        out_specs=pl.BlockSpec((tm, Np), lambda i: (i, 0)),
        compiler_params=_cparams("parallel"),
    )(xf, w1.T.astype(MXU_DTYPE), b1.reshape(1, Hc).astype(jnp.float32), w2p, b2p)
    return out[:M, :n_class]


# ----------------------------------------------------------------------------
# Model pieces
# ----------------------------------------------------------------------------
def residual_cnn(xc, blk):
    # xc: (B, F, T, C) channels-last
    a = cnn_ln_gelu(xc, blk['ln1_g'], blk['ln1_b'])     # dropout1: identity (eval)
    y = conv3x3_cl(a, blk['w1'], blk['b1'])
    a2 = cnn_ln_gelu(y, blk['ln2_g'], blk['ln2_b'])     # dropout2: identity (eval)
    y2 = conv3x3_cl(a2, blk['w2'], blk['b2'])
    return y2 + xc                                      # XLA fuses slice + residual add


def bigru_layer(x, layer):
    # Reproduces the PyTorch quirk: only layer 0 is batch_first=True; later
    # layers interpret axis 0 as "seq" and axis 1 as "batch" without transposing.
    d0, d1, F = x.shape
    xn = ln_gelu_rows(x.reshape(d0 * d1, F),
                      layer['ln_g'], layer['ln_b']).reshape(d0, d1, F)
    xs = xn.transpose(1, 0, 2) if layer['batch_first'] else xn     # (T, B, F)
    out = bigru(xs, layer)                                          # (T, B, 2H)
    if layer['batch_first']:
        out = out.transpose(1, 0, 2)
    return out  # dropout: identity (eval mode)


def speech_recognition_forward(p, x):
    # x: (B, 1, n_feats, time) NCHW, same as the PyTorch module.
    xc = conv2d_stem(x, p['cnn_w'], p['cnn_b'], stride=2, padding=1)  # (B, F, T, 32)
    for blk in p['rescnn']:
        xc = residual_cnn(xc, blk)
    B, F, T, C = xc.shape
    # PyTorch: view(B, C*F, T).transpose(1, 2) -> feature index = c*F + f
    x2 = xc.transpose(0, 2, 3, 1).reshape(B, T, C * F)
    x2 = matmul_bias(x2.reshape(B * T, C * F),
                     p['fc_w'].T, p['fc_b']).reshape(B, T, -1)       # fully_connected
    for layer in p['birnn']:
        x2 = bigru_layer(x2, layer)
    d0, d1, Fc = x2.shape
    out = classifier(x2.reshape(d0 * d1, Fc), p['clf_w1'], p['clf_b1'],
                     p['clf_w2'], p['clf_b2'])                       # Linear+GELU+Linear
    return out.reshape(d0, d1, -1)


# ----------------------------------------------------------------------------
# Deterministic parameter initialization (shapes follow the PyTorch __init__)
# ----------------------------------------------------------------------------
def init_params(key, n_cnn_layers, n_rnn_layers, rnn_dim, n_class, n_feats):
    nf = n_feats // 2
    keys = iter(jax.random.split(key, 256))

    def unif(shape, fan_in):
        bound = 1.0 / np.sqrt(fan_in)
        return jax.random.uniform(next(keys), shape, jnp.float32, -bound, bound)

    p = {'cnn_w': unif((32, 1, 3, 3), 9), 'cnn_b': unif((32,), 9), 'rescnn': [],
         'birnn': []}
    for _ in range(n_cnn_layers):
        p['rescnn'].append({
            'ln1_g': jnp.ones((nf,), jnp.float32), 'ln1_b': jnp.zeros((nf,), jnp.float32),
            'ln2_g': jnp.ones((nf,), jnp.float32), 'ln2_b': jnp.zeros((nf,), jnp.float32),
            'w1': unif((32, 32, 3, 3), 32 * 9), 'b1': unif((32,), 32 * 9),
            'w2': unif((32, 32, 3, 3), 32 * 9), 'b2': unif((32,), 32 * 9),
        })
    p['fc_w'] = unif((rnn_dim, nf * 32), nf * 32)
    p['fc_b'] = unif((rnn_dim,), nf * 32)
    for i in range(n_rnn_layers):
        in_dim = rnn_dim if i == 0 else rnn_dim * 2
        H = rnn_dim
        layer = {'ln_g': jnp.ones((in_dim,), jnp.float32),
                 'ln_b': jnp.zeros((in_dim,), jnp.float32),
                 'batch_first': (i == 0)}
        for sfx in ('', '_rev'):
            layer['w_ih' + sfx] = unif((3 * H, in_dim), H)
            layer['w_hh' + sfx] = unif((3 * H, H), H)
            layer['b_ih' + sfx] = unif((3 * H,), H)
            layer['b_hh' + sfx] = unif((3 * H,), H)
        p['birnn'].append(layer)
    p['clf_w1'] = unif((rnn_dim, rnn_dim * 2), rnn_dim * 2)
    p['clf_b1'] = unif((rnn_dim,), rnn_dim * 2)
    p['clf_w2'] = unif((n_class, rnn_dim), rnn_dim)
    p['clf_b2'] = unif((n_class,), rnn_dim)
    return p


if __name__ == "__main__":
    n_cnn_layers, n_rnn_layers = 2, 2
    rnn_dim, n_class, n_feats, time_steps = 32, 10, 16, 16

    key = jax.random.PRNGKey(0)
    kx, kp = jax.random.split(key)
    x = jax.random.normal(kx, (2, 1, n_feats, time_steps), jnp.float32)  # (B,1,feat,time)
    params = init_params(kp, n_cnn_layers, n_rnn_layers, rnn_dim, n_class, n_feats)

    out = speech_recognition_forward(params, x)
    out = jax.block_until_ready(out)
    assert out.shape == (2, time_steps // 2, n_class), out.shape
    assert bool(jnp.all(jnp.isfinite(out)))
    print("KERNEL_OK")
</pallas_src>

<mosaic_0001>
module attributes {stable_mosaic.version = 11 : i64} {
  func.func @_matmul_bias_kernel(%arg0: i32, %arg1: memref<64x9xbf16, #tpu.memory_space<vmem>>, %arg2: memref<9x32xbf16, #tpu.memory_space<vmem>>, %arg3: memref<1x32xf32, #tpu.memory_space<vmem>>, %arg4: memref<64x32xf32, #tpu.memory_space<vmem>>) attributes {dimension_semantics = [#tpu.dimension_semantics<parallel>], iteration_bounds = array<i64: 2>, scalar_prefetch = 0 : i64, scratch_operands = 0 : i64, tpu.core_type = #tpu.core_type<tc>, window_params = [{transform_indices = @transform_0, window_bounds = array<i64: 64, 9>}, {pipeline_mode = #tpu.pipeline_mode<synchronous>, transform_indices = @transform_1, window_bounds = array<i64: 9, 32>}, {pipeline_mode = #tpu.pipeline_mode<synchronous>, transform_indices = @transform_2, window_bounds = array<i64: 1, 32>}, {transform_indices = @transform_3, window_bounds = array<i64: 64, 32>}]} {
    %c0 = arith.constant 0 : index
    %c0_0 = arith.constant 0 : index
    %0 = vector.load %arg1[%c0, %c0_0] : memref<64x9xbf16, #tpu.memory_space<vmem>>, vector<64x9xbf16>
    %c0_1 = arith.constant 0 : index
    %c0_2 = arith.constant 0 : index
    %1 = vector.load %arg2[%c0_1, %c0_2] : memref<9x32xbf16, #tpu.memory_space<vmem>>, vector<9x32xbf16>
    %cst = arith.constant dense<0.000000e+00> : vector<64x32xf32>
    %2 = tpu.matmul %0, %1, %cst {dimension_numbers = #tpu.dot_dimension_numbers<[1], [0], [0], [1], [0, 0, 1, 1], [], []>} : vector<64x9xbf16>, vector<9x32xbf16>, vector<64x32xf32> -> vector<64x32xf32>
    %c0_3 = arith.constant 0 : index
    %c0_4 = arith.constant 0 : index
    %3 = vector.load %arg3[%c0_3, %c0_4] : memref<1x32xf32, #tpu.memory_space<vmem>>, vector<1x32xf32>
    %4 = vector.broadcast %3 : vector<1x32xf32> to vector<64x32xf32>
    %5 = arith.addf %2, %4 : vector<64x32xf32>
    %c0_5 = arith.constant 0 : index
    %c0_6 = arith.constant 0 : index
    %6 = vector.load %arg4[%c0_5, %c0_6] : memref<64x32xf32, #tpu.memory_space<vmem>>, vector<64x32xf32>
    tpu.vector_store %arg4[%c0_5, %c0_6], %5 {strides = array<i32>} : memref<64x32xf32, #tpu.memory_space<vmem>>, vector<64x32xf32>,
    return
  }
  func.func @transform_0(%arg0: i32) -> (i32, i32) {
    %c0_i32 = arith.constant 0 : i32
    %c0_i32_0 = arith.constant 0 : i32
    return %arg0, %c0_i32 : i32, i32
  }
  func.func @transform_1(%arg0: i32) -> (i32, i32) {
    %c0_i32 = arith.constant 0 : i32
    %c0_i32_0 = arith.constant 0 : i32
    %c0_i32_1 = arith.constant 0 : i32
    return %c0_i32, %c0_i32_0 : i32, i32
  }
  func.func @transform_2(%arg0: i32) -> (i32, i32) {
    %c0_i32 = arith.constant 0 : i32
    %c0_i32_0 = arith.constant 0 : i32
    %c0_i32_1 = arith.constant 0 : i32
    return %c0_i32, %c0_i32_0 : i32, i32
  }
  func.func @transform_3(%arg0: i32) -> (i32, i32) {
    %c0_i32 = arith.constant 0 : i32
    %c0_i32_0 = arith.constant 0 : i32
    return %arg0, %c0_i32 : i32, i32
  }
}

</mosaic_0001>

<llo_original>
// kernel: tpu_custom_call.1
$region0: #{tpu_custom_call.1}
  #allocation0 [shape = 'u32[]', space=smem, size = 0x4, offset = 0x4, fixed_abs, tag = 'smem constant byte address 0x4 - core index']
  #allocation1 [shape = 'u32[144,128]{1,0:T(1,128)}', space=vmem, size = 0x12000, scoped, tag = 'internal scratch']
  %s0 = inlined_call_operand.vmem [shape: bf16[128,9], index: 0, kind: input, shape index: {}]
  %s1 = inlined_call_operand.vmem [shape: bf16[9,32], index: 1, kind: input, shape index: {}]
  %s2 = inlined_call_operand.vmem [shape: f32[1,32], index: 2, kind: input, shape index: {}]
  %s3 = inlined_call_operand.vmem [shape: f32[128,32], index: 3, kind: output, shape index: {}]
  %s4 = sld [smem:[#allocation0]]
  $region45: #{tpu_custom_call.1} parent=0
    _
  %s6 = ssub.s32 1, %s4
  %s7 = scalar_select 0, %s6, %s4
  loop: start=0, step=1, limit=4
  $region2: #{tpu_custom_call.1} parent=0 // loop_pre_header
    _
  $region3: #{tpu_custom_call.1} parent=0 // loop_header
    %s9 = sphi 0, %s13
    %p10 = scmp.ge.s32.totalorder %s9, 4
    %s19 = sphi 0, %s21
    %s22 = sphi 0, %s19
    %s23 = sphi 0, %s22
    %s39 = sphi 0, %s23
    %s43 = sphi 0, %s43
    %s45 = sphi 0, %s43
    %s46 = sphi 0, %s45
    %s60 = sphi 0, %s46
    %s64 = sphi 0, %s64
    %s66 = sphi 0, %s64
    %s67 = sphi 0, %s66
    %s81 = sphi 0, %s67
    %s87 = sphi 0, %s89
    %s90 = sphi 0, %s87
    %s91 = sphi 0, %s90
    %s107 = sphi 0, %s91
  $region4: #{tpu_custom_call.1} parent=0 // loop_header_branch
    %12 = sbr.rel (%p10) target = $region8
  $region5: #{tpu_custom_call.1} parent=0 // loop_body
    %s14 = ssub.s32 %s9, 1
    %s15 = ssub.s32 %s9, 2
    %s16 = sadd.s32 %s9, 1
    %s17 = ssub.s32 %s9, %s16
    %p18 = scmp.eq.s32.totalorder %s17, 0
    %s20 = sadd.s32 %s19, 1
    %s21 = scalar_select %p18, %s19, %s20
    %p24 = pneg %p18
    %p25 = scmp.eq.s32.totalorder %s9, 1
    %p26 = por %p24, %p25
    %p27 = scmp.ne.s32.totalorder %s19, %s22
    %p28 = scmp.eq.s32.totalorder %s9, 0
    %p29 = por %p27, %p28
    %p30 = scmp.ne.s32.totalorder %s19, %s22
    %p31 = scmp.eq.s32.totalorder %s14, 1
    %p32 = por %p30, %p31
    %p33 = scmp.ne.s32.totalorder %s22, %s23
    %p34 = scmp.eq.s32.totalorder %s14, 0
    %p35 = por %p33, %p34
    %p36 = scmp.ne.s32.totalorder %s22, %s23
    %p37 = scmp.eq.s32.totalorder %s15, 1
    %p38 = por %p36, %p37
    %p40 = scmp.ne.s32.totalorder %s23, %s39
    %p41 = scmp.eq.s32.totalorder %s15, 0
    %p42 = por %p40, %p41
    %s44 = sadd.s32 %s43, 1
    %p47 = scmp.eq.s32.totalorder %s9, 1
    %p48 = scmp.ne.s32.totalorder %s43, %s45
    %p49 = scmp.eq.s32.totalorder %s9, 0
    %p50 = por %p48, %p49
    %p51 = scmp.ne.s32.totalorder %s43, %s45
    %p52 = scmp.eq.s32.totalorder %s14, 1
    %p53 = por %p51, %p52
    %p54 = scmp.ne.s32.totalorder %s45, %s46
    %p55 = scmp.eq.s32.totalorder %s14, 0
    %p56 = por %p54, %p55
    %p57 = scmp.ne.s32.totalorder %s45, %s46
    %p58 = scmp.eq.s32.totalorder %s15, 1
    %p59 = por %p57, %p58
    %p61 = scmp.ne.s32.totalorder %s46, %s60
    %p62 = scmp.eq.s32.totalorder %s15, 0
    %p63 = por %p61, %p62
    %s65 = sadd.s32 %s64, 1
    %p68 = scmp.eq.s32.totalorder %s9, 1
    %p69 = scmp.ne.s32.totalorder %s64, %s66
    %p70 = scmp.eq.s32.totalorder %s9, 0
    %p71 = por %p69, %p70
    %p72 = scmp.ne.s32.totalorder %s64, %s66
    %p73 = scmp.eq.s32.totalorder %s14, 1
    %p74 = por %p72, %p73
    %p75 = scmp.ne.s32.totalorder %s66, %s67
    %p76 = scmp.eq.s32.totalorder %s14, 0
    %p77 = por %p75, %p76
    %p78 = scmp.ne.s32.totalorder %s66, %s67
    %p79 = scmp.eq.s32.totalorder %s15, 1
    %p80 = por %p78, %p79
    %p82 = scmp.ne.s32.totalorder %s67, %s81
    %p83 = scmp.eq.s32.totalorder %s15, 0
    %p84 = por %p82, %p83
    %s85 = ssub.s32 %s9, %s16
    %p86 = scmp.eq.s32.totalorder %s85, 0
    %s88 = sadd.s32 %s87, 1
    %s89 = scalar_select %p86, %s87, %s88
    %p92 = pneg %p86
    %p93 = scmp.eq.s32.totalorder %s9, 1
    %p94 = por %p92, %p93
    %p95 = scmp.ne.s32.totalorder %s87, %s90
    %p96 = scmp.eq.s32.totalorder %s9, 0
    %p97 = por %p95, %p96
    %p98 = scmp.ne.s32.totalorder %s87, %s90
    %p99 = scmp.eq.s32.totalorder %s14, 1
    %p100 = por %p98, %p99
    %p101 = scmp.ne.s32.totalorder %s90, %s91
    %p102 = scmp.eq.s32.totalorder %s14, 0
    %p103 = por %p101, %p102
    %p104 = scmp.ne.s32.totalorder %s90, %s91
    %p105 = scmp.eq.s32.totalorder %s15, 1
    %p106 = por %p104, %p105
    %p108 = scmp.ne.s32.totalorder %s91, %s107
    %p109 = scmp.eq.s32.totalorder %s15, 0
    %p110 = por %p108, %p109
    %p111 = scmp.le.s32.totalorder 1, %s9
    %p112 = scmp.lt.s32.totalorder %s9, 3
    %p113 = pnand %p111, %p112
    %p114 = pneg %p113
    // Predicated region
    $region9: #{tpu_custom_call.1} parent=5 // pred_check
      _
    $region10: #{tpu_custom_call.1} parent=5 // pred_check_branch
      %116 = sbr.rel (%p113) target = $region12
    $region11: #{tpu_custom_call.1} parent=5 // pred_region
      %s117 = ssub.s32 %s9, 1
      // Predicated region
      $region13: #{tpu_custom_call.1} parent=11 // pred_check
        %p118 = pneg %p56
      $region14: #{tpu_custom_call.1} parent=11 // pred_check_branch
        %120 = sbr.rel (%p118) target = $region16
      $region15: #{tpu_custom_call.1} parent=11 // pred_region
        _
      $region16: #{tpu_custom_call.1} parent=11 // pred_fallthru
        _
      // Predicated region
      $region17: #{tpu_custom_call.1} parent=11 // pred_check
        %p121 = pneg %p77
      $region18: #{tpu_custom_call.1} parent=11 // pred_check_branch
        %123 = sbr.rel (%p121) target = $region20
      $region19: #{tpu_custom_call.1} parent=11 // pred_region
        _
      $region20: #{tpu_custom_call.1} parent=11 // pred_fallthru
        _
    $region12: #{tpu_custom_call.1} parent=5 // pred_fallthru
      _
    %p124 = scmp.lt.s32.totalorder %s9, 2
    // Predicated region
    $region21: #{tpu_custom_call.1} parent=5 // pred_check
      %p125 = pneg %p124
    $region22: #{tpu_custom_call.1} parent=5 // pred_check_branch
      %127 = sbr.rel (%p125) target = $region24
    $region23: #{tpu_custom_call.1} parent=5 // pred_region
      // Predicated region
      $region25: #{tpu_custom_call.1} parent=23 // pred_check
        %p128 = pneg %p29
      $region26: #{tpu_custom_call.1} parent=23 // pred_check_branch
        %130 = sbr.rel (%p128) target = $region28
      $region27: #{tpu_custom_call.1} parent=23 // pred_region
        %s131 = smul.u32 8, %s9
        %p132 = scmp.lt.s32.totalorder %s131, 15
        %s133 = scalar_select %p132, %s131, 15
        %s134 = smul.addr %s133, 4
        %s135 = scalar_lea.vmem %s0, %s134
        %s136 = smul.u32 8, %s9
      $region28: #{tpu_custom_call.1} parent=23 // pred_fallthru
        _
    $region24: #{tpu_custom_call.1} parent=5 // pred_fallthru
      _
    %p137 = scmp.le.s32.totalorder 1, %s9
    %p138 = scmp.lt.s32.totalorder %s9, 3
    %p139 = pnand %p137, %p138
    %p140 = pneg %p139
    // Predicated region
    $region29: #{tpu_custom_call.1} parent=5 // pred_check
      _
    $region30: #{tpu_custom_call.1} parent=5 // pred_check_branch
      %142 = sbr.rel (%p139) target = $region32
    $region31: #{tpu_custom_call.1} parent=5 // pred_region
      %s143 = ssub.s32 %s9, 1
      %s144 = smul.u32 8, %s14
      %p145 = scmp.lt.s32.totalorder %s144, 15
      %s146 = scalar_select %p145, %s144, 15
      %s147 = smul.addr %s146, 4
      %s148 = scalar_lea.vmem %s0, %s147
      %p149 = pneg %p35
      %p150 = pneg %p32
      %p151 = pneg %p56
      %p152 = pneg %p53
      %p153 = pneg %p77
      %p154 = pneg %p74
      %p155 = pneg %p103
      %p156 = pneg %p100
      %s157 = smul.u32 8, %s14
      %p158 = scmp.lt.s32.totalorder %s157, 15
      %s159 = scalar_select %p158, %s157, 15
      %s160 = smul.addr %s159, 8
      %s161 = scalar_lea.vmem %s3, %s160
      %s162 = smul.u32 8, %s14
      %p163 = scmp.lt.s32.totalorder %s162, 15
      %s164 = scalar_select %p163, %s162, 15
      %s165 = smul.addr %s164, 4
      %s166 = scalar_lea.vmem %s0, %s165
      %s167 = smul.u32 8, %s14
      %s168 = smul.u32 8, %s14
      %p169 = scmp.lt.s32.totalorder %s168, 15
      %s170 = scalar_select %p169, %s168, 15
      %s171 = smul.addr %s170, 8
      %s172 = scalar_lea.vmem %s3, %s171
      %s173 = smul.u32 8, %s14
      %v175 = vld [vmem:[%s166] sm:$0xf]
      %v176 = vld [vmem:[%s166 + $0x4] sm:$0xf]
      %v177 = vld [vmem:[%s166 + $0x8] sm:$0xf]
      %v178 = vld [vmem:[%s166 + $0xc] sm:$0xf]
      %v179 = vld [vmem:[%s166 + $0x10] sm:$0xf]
      %v180 = vld [vmem:[%s166 + $0x14] sm:$0xf]
      %v181 = vld [vmem:[%s166 + $0x18] sm:$0xf]
      %v182 = vld [vmem:[%s166 + $0x1c] sm:$0xf]
      %v183 = vld [vmem:[%s1] sm:$0xf]
      %v184 = vld [vmem:[%s1 + $0x4] sm:$0x1]
      %v185 = vld [vmem:[%s2] sm:$0x1]
      %v187 = vlaneseq
      %v188 = vshrl.u32 %v187, 7
      %v189 = vsub.s32 0, %v188
      %v190 = vrot.slane %v185, %v189
      %v200 = vunpack.c.l.b16 %v175
      %v201 = vunpack.c.l.b16 %v176
      %v202 = vunpack.c.l.b16 %v177
      %v203 = vunpack.c.l.b16 %v178
      %v204 = vunpack.c.l.b16 %v179
      %v205 = vunpack.c.l.b16 %v180
      %v206 = vunpack.c.l.b16 %v181
      %v207 = vunpack.c.l.b16 %v182
      %v208 = vpack.c.b16 %v201, %v200
      %v209 = vpack.c.b16 %v203, %v202
      %v210 = vpack.c.b16 %v205, %v204
      %v211 = vpack.c.b16 %v207, %v206
      %v214 = vunpack.c.l.b16 %v183
      %v215 = vunpack.c.l.b16 %v184
      %v216 = vpack.c.b16 %v215, %v214
      %vm217 = vcmask 72704
      %v219 = vsel %vm217, %v208, 0
      %v222 = vsel %vm217, %v209, 0
      %v225 = vsel %vm217, %v210, 0
      %v228 = vsel %vm217, %v211, 0
      %vm230 = vcmask 1043456
      %vm231 = vcmask 1044480
      %v232 = vsel %vm230, 4294967295, 65535
      %v233 = vsel %vm231, %v232, 0
      %v235 = vand.u32 %v216, %v233
      %237 = vmatprep.subr.bf16.mxu0 0
      %238 = vmatpush1.bf16.msra.mxu0 %v235
      %239 = vmatprep.subr.bf16.mxu0 0
      %240 = vmatpush1.bf16.msra.mxu0 0
      %241 = vmatprep.subr.bf16.mxu0 0
      %242 = vmatpush1.bf16.msra.mxu0 0
      %243 = vmatprep.subr.bf16.mxu0 0
      %244 = vmatpush1.bf16.msra.mxu0 0
      %245 = vmatprep.subr.bf16.mxu0 0
      %246 = vmatpush1.bf16.msra.mxu0 0
      %247 = vmatprep.subr.bf16.mxu0 0
      %248 = vmatpush1.bf16.msra.mxu0 0
      %249 = vmatprep.subr.bf16.mxu0 0
      %250 = vmatpush1.bf16.msra.mxu0 0
      %251 = vmatprep.subr.bf16.mxu0 0
      %252 = vmatpush1.bf16.msra.mxu0 0
      %253 = vmatprep.subr.bf16.mxu0 0
      %254 = vmatpush1.bf16.msra.mxu0 0
      %255 = vmatprep.subr.bf16.mxu0 0
      %256 = vmatpush1.bf16.msra.mxu0 0
      %257 = vmatprep.subr.bf16.mxu0 0
      %258 = vmatpush1.bf16.msra.mxu0 0
      %259 = vmatprep.subr.bf16.mxu0 0
      %260 = vmatpush1.bf16.msra.mxu0 0
      %261 = vmatprep.subr.bf16.mxu0 0
      %262 = vmatpush1.bf16.msra.mxu0 0
      %263 = vmatprep.subr.bf16.mxu0 0
      %264 = vmatpush1.bf16.msra.mxu0 0
      %265 = vmatprep.subr.bf16.mxu0 0
      %266 = vmatpush1.bf16.msra.mxu0 0
      %267 = vmatprep.subr.bf16.mxu0 0
      %268 = vmatpush1.bf16.msra.mxu0 0
      %269 = vmatprep.mubr.bf16.mxu0 0
      %270 = vmatmul.mubr.bf16.gmra.mrb[0].mxu0 %v219
      %v271 = vpop.f32.mrb[0].mxu0
      %v272 = vadd.f32 %v190, %v271
      %v273 = vpop.f32.mrb[0].mxu0
      %v274 = vpop.f32.mrb[0].mxu0
      %v275 = vadd.f32 %v190, %v274
      %v276 = vpop.f32.mrb[0].mxu0
      %277 = vmatprep.mubr.bf16.mxu0 0
      %278 = vmatmul.mubr.bf16.gmra.mrb[0].mxu0 %v222
      %v279 = vpop.f32.mrb[0].mxu0
      %v280 = vadd.f32 %v190, %v279
      %v281 = vpop.f32.mrb[0].mxu0
      %v282 = vpop.f32.mrb[0].mxu0
      %v283 = vadd.f32 %v190, %v282
      %v284 = vpop.f32.mrb[0].mxu0
      %285 = vmatprep.mubr.bf16.mxu0 0
      %286 = vmatmul.mubr.bf16.gmra.mrb[0].mxu0 %v225
      %v287 = vpop.f32.mrb[0].mxu0
      %v288 = vadd.f32 %v190, %v287
      %v289 = vpop.f32.mrb[0].mxu0
      %v290 = vpop.f32.mrb[0].mxu0
      %v291 = vadd.f32 %v190, %v290
      %v292 = vpop.f32.mrb[0].mxu0
      %293 = vmatprep.mubr.bf16.mxu0 0
      %294 = vmatmul.mubr.bf16.gmra.mrb[0].mxu0 %v228
      %v295 = vpop.f32.mrb[0].mxu0
      %v296 = vadd.f32 %v190, %v295
      %v297 = vpop.f32.mrb[0].mxu0
      %v298 = vpop.f32.mrb[0].mxu0
      %v299 = vadd.f32 %v190, %v298
      %v300 = vpop.f32.mrb[0].mxu0
      %301 = vdwg.mxu0
      %vm302 = vcmask 261120
      %303 = vst.msk [vmem:[%s172] sm:$0xff] %vm302, %v272
      %304 = vst.msk [vmem:[%s172 + $0x8] sm:$0xff] %vm302, %v275
      %305 = vst.msk [vmem:[%s172 + $0x10] sm:$0xff] %vm302, %v280
      %306 = vst.msk [vmem:[%s172 + $0x18] sm:$0xff] %vm302, %v283
      %307 = vst.msk [vmem:[%s172 + $0x20] sm:$0xff] %vm302, %v288
      %308 = vst.msk [vmem:[%s172 + $0x28] sm:$0xff] %vm302, %v291
      %309 = vst.msk [vmem:[%s172 + $0x30] sm:$0xff] %vm302, %v296
      %310 = vst.msk [vmem:[%s172 + $0x38] sm:$0xff] %vm302, %v299
      %s311 = smul.u32 8, %s14
      %p312 = scmp.lt.s32.totalorder %s311, 15
      %s313 = scalar_select %p312, %s311, 15
      %s314 = smul.addr %s313, 8
      %s315 = scalar_lea.vmem %s3, %s314
      // Predicated region
      $region33: #{tpu_custom_call.1} parent=31 // pred_check
        %p316 = pneg %p100
      $region34: #{tpu_custom_call.1} parent=31 // pred_check_branch
        %318 = sbr.rel (%p316) target = $region36
      $region35: #{tpu_custom_call.1} parent=31 // pred_region
        %s319 = smul.u32 8, %s14
      $region36: #{tpu_custom_call.1} parent=31 // pred_fallthru
        _
    $region32: #{tpu_custom_call.1} parent=5 // pred_fallthru
      _
    %p320 = scmp.le.s32.totalorder 2, %s9
    // Predicated region
    $region37: #{tpu_custom_call.1} parent=5 // pred_check
      %p321 = pneg %p320
    $region38: #{tpu_custom_call.1} parent=5 // pred_check_branch
      %323 = sbr.rel (%p321) target = $region40
    $region39: #{tpu_custom_call.1} parent=5 // pred_region
      %s324 = ssub.s32 %s9, 2
      // Predicated region
      $region41: #{tpu_custom_call.1} parent=39 // pred_check
        %p325 = pneg %p106
      $region42: #{tpu_custom_call.1} parent=39 // pred_check_branch
        %327 = sbr.rel (%p325) target = $region44
      $region43: #{tpu_custom_call.1} parent=39 // pred_region
        %s328 = smul.u32 8, %s15
        %p329 = scmp.lt.s32.totalorder %s328, 15
        %s330 = scalar_select %p329, %s328, 15
        %s331 = smul.addr %s330, 8
        %s332 = scalar_lea.vmem %s3, %s331
      $region44: #{tpu_custom_call.1} parent=39 // pred_fallthru
        _
    $region40: #{tpu_custom_call.1} parent=5 // pred_fallthru
      _
  $region6: #{tpu_custom_call.1} parent=0 // loop_footer
    %s13 = sadd.s32 1, %s9
  $region7: #{tpu_custom_call.1} parent=0 // loop_footer_branch
    %8 = sbr.rel target = $region3
  $region8: #{tpu_custom_call.1} parent=0 // loop_exit
    _

</llo_original>
